<compile_context>
chip_gen: v5e
topology: v5e:2x2
jax: 0.10.0
libtpu: 0.0.40
codegen_flags: <defaults>
</compile_context>

<pallas_src>
import functools

import jax
import jax.numpy as jnp
from jax.experimental import pallas as pl
from jax.experimental.pallas import tpu as pltpu

EPS = 1e-6

# Below this element count a plain fused XLA reduction beats the pallas_call
# launch/pipeline overhead on every generation.
_MIN_PALLAS_ELEMENTS = 1 << 17

# Cap the lane extent of a block at 64 chunks of 128 lanes so the statically
# unrolled per-chunk accumulate loop stays small.
_MAX_HW_TILE = 64 * 128  # 8192 lanes


def _round_up(x: int, m: int) -> int:
    return ((x + m - 1) // m) * m


def _sublane_multiple(dtype) -> int:
    """Minimum sublane multiple for a dtype: 8 (f32), 16 (bf16), 32 (int8/fp8)."""
    itemsize = jnp.dtype(dtype).itemsize
    return 8 * max(1, 4 // itemsize)


def _per_input_tile_bytes() -> int:
    """Per-input block budget, generation-aware (DMA-bound streaming kernel)."""
    try:
        kind = jax.devices()[0].device_kind.lower()
    except Exception:  # pragma: no cover - defensive
        kind = ""
    if "v7" in kind:
        return 6 * 1024 * 1024   # 3.2 TB/s HBM: amortize per-step overhead
    if "v6" in kind:
        return 4 * 1024 * 1024   # small (~1-3%) roofline gain vs 2 MiB
    return 2 * 1024 * 1024       # v5e: 8 MiB pipeline fits 16 MiB scoped VMEM


def _soft_dice_kernel(p_ref, t_ref, out_ref, inter_acc, denom_acc,
                      *, hw, hw_tile, need_mask):
    """Accumulate per-lane partials of sum(p*t) and sum(p^2+t^2); finalize ratio.

    inter_acc / denom_acc: (row_tile, 128) f32 scratch.  Each grid step only
    does VALU adds of 128-lane chunks; the cross-lane reduce + divide happen
    once, on the last HW step.
    """
    k = pl.program_id(1)

    @pl.when(k == 0)
    def _():
        inter_acc[...] = jnp.zeros_like(inter_acc)
        denom_acc[...] = jnp.zeros_like(denom_acc)

    row_tile = inter_acc.shape[0]
    n_chunks = hw_tile // 128

    inter = inter_acc[...]
    denom = denom_acc[...]

    if need_mask:
        # Hoisted iota (don't rebuild the broadcast inside the chunk loop).
        lane = jax.lax.broadcasted_iota(jnp.int32, (row_tile, 128), 1)
        base = k * hw_tile

    # Static, lane-aligned 128-wide chunks: pure VALU work, no XLU in the hot loop.
    for c in range(n_chunks):
        sl = slice(c * 128, (c + 1) * 128)
        p = p_ref[:, sl].astype(jnp.float32)
        t = t_ref[:, sl].astype(jnp.float32)
        if need_mask:
            valid = (base + (c * 128) + lane) < hw
            p = jnp.where(valid, p, 0.0)
            t = jnp.where(valid, t, 0.0)
        inter = inter + p * t
        denom = denom + (p * p + t * t)

    inter_acc[...] = inter
    denom_acc[...] = denom

    @pl.when(k == pl.num_programs(1) - 1)
    def _():
        # Single cross-lane reduce + ratio per row tile.
        inter_row = jnp.sum(inter_acc[...], axis=-1, keepdims=True)
        denom_row = jnp.sum(denom_acc[...], axis=-1, keepdims=True)
        out_ref[...] = (2.0 * inter_row + EPS) / (denom_row + EPS)


def _soft_dice_pallas(pred_2d: jax.Array, targ_2d: jax.Array) -> jax.Array:
    """pred_2d/targ_2d: (R, HW). Returns per-row dice, shape (R,), f32."""
    r, hw = pred_2d.shape
    dtype = pred_2d.dtype
    itemsize = jnp.dtype(dtype).itemsize
    sublane = _sublane_multiple(dtype)
    budget = _per_input_tile_bytes()

    # --- tile sizing -------------------------------------------------------
    hw_tile = min(_round_up(hw, 128), _MAX_HW_TILE)           # lane multiple

    row_target = max(sublane, (budget // (hw_tile * itemsize)) // sublane * sublane)
    row_tile = min(row_target, 256, _round_up(r, sublane))
    # Keep the "parallel" row axis >= 2 grid steps whenever R allows it so
    # v7x's second TensorCore isn't idle.
    if pl.cdiv(r, row_tile) < 2 and r > sublane:
        row_tile = _round_up(pl.cdiv(r, 2), sublane)

    grid = (pl.cdiv(r, row_tile), pl.cdiv(hw, hw_tile))
    need_mask = (hw % hw_tile) != 0   # ragged HW tail handled in-kernel

    kernel = functools.partial(
        _soft_dice_kernel, hw=hw, hw_tile=hw_tile, need_mask=need_mask)

    # Default double-buffering: 2 inputs x 2 buffers. Only raise the scoped
    # VMEM limit when the footprint actually needs it (v6e/v7x big tiles).
    pipeline_bytes = 2 * 2 * row_tile * hw_tile * itemsize
    vmem_limit = None
    if pipeline_bytes > (12 << 20):
        vmem_limit = pipeline_bytes + (16 << 20)   # <= ~40 MiB, fits v7x's 64 MiB

    cost = pl.CostEstimate(
        flops=6 * r * hw,
        transcendentals=0,
        bytes_accessed=2 * r * hw * itemsize + r * 4,
    )

    dice_rows = pl.pallas_call(
        kernel,
        out_shape=jax.ShapeDtypeStruct((r, 1), jnp.float32),
        grid_spec=pltpu.PrefetchScalarGridSpec(
            num_scalar_prefetch=0,
            grid=grid,
            in_specs=[
                pl.BlockSpec((row_tile, hw_tile), lambda i, k: (i, k)),
                pl.BlockSpec((row_tile, hw_tile), lambda i, k: (i, k)),
            ],
            out_specs=pl.BlockSpec((row_tile, 1), lambda i, k: (i, 0)),
            scratch_shapes=[
                pltpu.VMEM((row_tile, 128), jnp.float32),  # inter per-lane acc
                pltpu.VMEM((row_tile, 128), jnp.float32),  # denom per-lane acc
            ],
        ),
        compiler_params=pltpu.CompilerParams(
            # row axis parallel (v7x megacore sharding), HW reduction last/arbitrary
            dimension_semantics=("parallel", "arbitrary"),
            vmem_limit_bytes=vmem_limit,
        ),
        cost_estimate=cost,
    )(pred_2d, targ_2d)

    return dice_rows[:, 0]


def _soft_dice_xla(pred_2d: jax.Array, targ_2d: jax.Array) -> jax.Array:
    p = pred_2d.astype(jnp.float32)
    t = targ_2d.astype(jnp.float32)
    inter = jnp.sum(p * t, axis=-1)
    denom = jnp.sum(p * p, axis=-1) + jnp.sum(t * t, axis=-1)
    return (2.0 * inter + EPS) / (denom + EPS)


def soft_dice(pred: jax.Array, target: jax.Array, use_pallas=None,
              downcast_to_bf16: bool = False) -> jax.Array:
    """Soft Dice coefficient between two (N, C, *spatial) tensors. Scalar f32.

    downcast_to_bf16: opt-in cast of f32 inputs to bf16 before the kernel
    (halves HBM traffic on this purely streaming, DMA-bound kernel; the kernel
    always accumulates in f32).  Off by default to preserve semantics.
    """
    assert pred.shape == target.shape, "pred/target shapes must match"
    n, c = pred.shape[0], pred.shape[1]
    r = n * c
    pred_2d = pred.reshape(r, -1)
    targ_2d = target.reshape(r, -1)

    if downcast_to_bf16 and pred_2d.dtype == jnp.float32:
        pred_2d = pred_2d.astype(jnp.bfloat16)
        targ_2d = targ_2d.astype(jnp.bfloat16)

    if use_pallas is None:
        use_pallas = pred_2d.size >= _MIN_PALLAS_ELEMENTS

    if use_pallas:
        dice = _soft_dice_pallas(pred_2d, targ_2d)
    else:
        dice = _soft_dice_xla(pred_2d, targ_2d)

    # Final scalar reduction (tiny) stays in plain JAX.
    return jnp.mean(dice)


def _reference_soft_dice(pred, target):
    p = pred.reshape(pred.shape[0], pred.shape[1], -1).astype(jnp.float32)
    t = target.reshape(target.shape[0], target.shape[1], -1).astype(jnp.float32)
    inter = jnp.sum(p * t, axis=-1)
    denom = jnp.sum(p * p, axis=-1) + jnp.sum(t * t, axis=-1)
    return jnp.mean((2.0 * inter + EPS) / (denom + EPS))


def _make_inputs(key, shape):
    k1, k2 = jax.random.split(key)
    pred = jax.nn.softmax(jax.random.normal(k1, shape, dtype=jnp.float32), axis=1)
    target = jax.nn.softmax(jax.random.normal(k2, shape, dtype=jnp.float32), axis=1)
    return pred, target


if __name__ == "__main__":
    key = jax.random.PRNGKey(0)
    ka, kb = jax.random.split(key)

    # Test 1: small, aligned shapes (the module's canonical config). Force the
    # Pallas path so the kernel itself is exercised (the auto dispatch would
    # take the fused-XLA path for a problem this small).
    pred, target = _make_inputs(ka, (2, 4, 16, 16))
    out = soft_dice(pred, target, use_pallas=True)
    out = jax.block_until_ready(out)
    ref = _reference_soft_dice(pred, target)
    assert jnp.allclose(out, ref, rtol=2e-4, atol=1e-6), (out, ref)

    # Test 2: ragged spatial extent (HW = 96*93 = 8928, not a multiple of the
    # 8192-lane tile) exercises the multi-step accumulation and the in-kernel
    # tail masking that replaced the wrapper-side jnp.pad.
    pred2, target2 = _make_inputs(kb, (2, 4, 96, 93))
    out2 = soft_dice(pred2, target2, use_pallas=True)
    out2 = jax.block_until_ready(out2)
    ref2 = _reference_soft_dice(pred2, target2)
    assert jnp.allclose(out2, ref2, rtol=2e-4, atol=1e-6), (out2, ref2)

    print("KERNEL_OK")
</pallas_src>

<mosaic_0001>
module attributes {stable_mosaic.version = 11 : i64} {
  func.func @_soft_dice_kernel(%arg0: i32, %arg1: i32, %arg2: memref<8x256xf32, #tpu.memory_space<vmem>>, %arg3: memref<8x256xf32, #tpu.memory_space<vmem>>, %arg4: memref<8x1xf32, #tpu.memory_space<vmem>>, %arg5: memref<8x128xf32, #tpu.memory_space<vmem>>, %arg6: memref<8x128xf32, #tpu.memory_space<vmem>>) attributes {dimension_semantics = [#tpu.dimension_semantics<parallel>, #tpu.dimension_semantics<arbitrary>], iteration_bounds = array<i64: 1, 1>, scalar_prefetch = 0 : i64, scratch_operands = 2 : i64, tpu.core_type = #tpu.core_type<tc>, window_params = [{transform_indices = @transform_0, window_bounds = array<i64: 8, 256>}, {transform_indices = @transform_1, window_bounds = array<i64: 8, 256>}, {transform_indices = @transform_2, window_bounds = array<i64: 8, 1>}]} {
    %c0_i32 = arith.constant 0 : i32
    %0 = arith.cmpi eq, %arg1, %c0_i32 : i32
    %1 = arith.extui %0 : i1 to i32
    %c0_i32_0 = arith.constant 0 : i32
    %2 = arith.cmpi ne, %1, %c0_i32_0 : i32
    scf.if %2 {
      %cst = arith.constant 0.000000e+00 : f32
      %26 = vector.broadcast %cst : f32 to vector<8x128xf32>
      %c0_17 = arith.constant 0 : index
      %c0_18 = arith.constant 0 : index
      %27 = vector.load %arg5[%c0_17, %c0_18] : memref<8x128xf32, #tpu.memory_space<vmem>>, vector<8x128xf32>
      tpu.vector_store %arg5[%c0_17, %c0_18], %26 {strides = array<i32>} : memref<8x128xf32, #tpu.memory_space<vmem>>, vector<8x128xf32>,
      %cst_19 = arith.constant 0.000000e+00 : f32
      %28 = vector.broadcast %cst_19 : f32 to vector<8x128xf32>
      %c0_20 = arith.constant 0 : index
      %c0_21 = arith.constant 0 : index
      %29 = vector.load %arg6[%c0_20, %c0_21] : memref<8x128xf32, #tpu.memory_space<vmem>>, vector<8x128xf32>
      tpu.vector_store %arg6[%c0_20, %c0_21], %28 {strides = array<i32>} : memref<8x128xf32, #tpu.memory_space<vmem>>, vector<8x128xf32>,
    } else {
    }
    %c0 = arith.constant 0 : index
    %c0_1 = arith.constant 0 : index
    %3 = vector.load %arg5[%c0, %c0_1] : memref<8x128xf32, #tpu.memory_space<vmem>>, vector<8x128xf32>
    %c0_2 = arith.constant 0 : index
    %c0_3 = arith.constant 0 : index
    %4 = vector.load %arg6[%c0_2, %c0_3] : memref<8x128xf32, #tpu.memory_space<vmem>>, vector<8x128xf32>
    %c0_4 = arith.constant 0 : index
    %c0_5 = arith.constant 0 : index
    %5 = vector.load %arg2[%c0_4, %c0_5] : memref<8x256xf32, #tpu.memory_space<vmem>>, vector<8x128xf32>
    %c0_6 = arith.constant 0 : index
    %c0_7 = arith.constant 0 : index
    %6 = vector.load %arg3[%c0_6, %c0_7] : memref<8x256xf32, #tpu.memory_space<vmem>>, vector<8x128xf32>
    %7 = arith.mulf %5, %6 : vector<8x128xf32>
    %8 = arith.addf %3, %7 : vector<8x128xf32>
    %9 = arith.mulf %5, %5 : vector<8x128xf32>
    %10 = arith.mulf %6, %6 : vector<8x128xf32>
    %11 = arith.addf %9, %10 : vector<8x128xf32>
    %12 = arith.addf %4, %11 : vector<8x128xf32>
    %c0_8 = arith.constant 0 : index
    %c128 = arith.constant 128 : index
    %13 = vector.load %arg2[%c0_8, %c128] : memref<8x256xf32, #tpu.memory_space<vmem>>, vector<8x128xf32>
    %c0_9 = arith.constant 0 : index
    %c128_10 = arith.constant 128 : index
    %14 = vector.load %arg3[%c0_9, %c128_10] : memref<8x256xf32, #tpu.memory_space<vmem>>, vector<8x128xf32>
    %15 = arith.mulf %13, %14 : vector<8x128xf32>
    %16 = arith.addf %8, %15 : vector<8x128xf32>
    %17 = arith.mulf %13, %13 : vector<8x128xf32>
    %18 = arith.mulf %14, %14 : vector<8x128xf32>
    %19 = arith.addf %17, %18 : vector<8x128xf32>
    %20 = arith.addf %12, %19 : vector<8x128xf32>
    %c0_11 = arith.constant 0 : index
    %c0_12 = arith.constant 0 : index
    %21 = vector.load %arg5[%c0_11, %c0_12] : memref<8x128xf32, #tpu.memory_space<vmem>>, vector<8x128xf32>
    tpu.vector_store %arg5[%c0_11, %c0_12], %16 {strides = array<i32>} : memref<8x128xf32, #tpu.memory_space<vmem>>, vector<8x128xf32>,
    %c0_13 = arith.constant 0 : index
    %c0_14 = arith.constant 0 : index
    %22 = vector.load %arg6[%c0_13, %c0_14] : memref<8x128xf32, #tpu.memory_space<vmem>>, vector<8x128xf32>
    tpu.vector_store %arg6[%c0_13, %c0_14], %20 {strides = array<i32>} : memref<8x128xf32, #tpu.memory_space<vmem>>, vector<8x128xf32>,
    %c0_i32_15 = arith.constant 0 : i32
    %23 = arith.cmpi eq, %arg1, %c0_i32_15 : i32
    %24 = arith.extui %23 : i1 to i32
    %c0_i32_16 = arith.constant 0 : i32
    %25 = arith.cmpi ne, %24, %c0_i32_16 : i32
    scf.if %25 {
      %c0_17 = arith.constant 0 : index
      %c0_18 = arith.constant 0 : index
      %26 = vector.load %arg5[%c0_17, %c0_18] : memref<8x128xf32, #tpu.memory_space<vmem>>, vector<8x128xf32>
      %cst = arith.constant dense<0.000000e+00> : vector<8xf32>
      %27 = vector.multi_reduction <add>, %26, %cst [1] : vector<8x128xf32> to vector<8xf32>
      %28 = vector.shape_cast %27 : vector<8xf32> to vector<8x1xf32>
      %c0_19 = arith.constant 0 : index
      %c0_20 = arith.constant 0 : index
      %29 = vector.load %arg6[%c0_19, %c0_20] : memref<8x128xf32, #tpu.memory_space<vmem>>, vector<8x128xf32>
      %cst_21 = arith.constant dense<0.000000e+00> : vector<8xf32>
      %30 = vector.multi_reduction <add>, %29, %cst_21 [1] : vector<8x128xf32> to vector<8xf32>
      %31 = vector.shape_cast %30 : vector<8xf32> to vector<8x1xf32>
      %cst_22 = arith.constant 2.000000e+00 : f32
      %32 = vector.broadcast %cst_22 : f32 to vector<8x1xf32>
      %33 = arith.mulf %32, %28 : vector<8x1xf32>
      %cst_23 = arith.constant 9.99999997E-7 : f32
      %34 = vector.broadcast %cst_23 : f32 to vector<8x1xf32>
      %35 = arith.addf %33, %34 : vector<8x1xf32>
      %cst_24 = arith.constant 9.99999997E-7 : f32
      %36 = vector.broadcast %cst_24 : f32 to vector<8x1xf32>
      %37 = arith.addf %31, %36 : vector<8x1xf32>
      %38 = arith.divf %35, %37 : vector<8x1xf32>
      %c0_25 = arith.constant 0 : index
      %c0_26 = arith.constant 0 : index
      %39 = vector.load %arg4[%c0_25, %c0_26] : memref<8x1xf32, #tpu.memory_space<vmem>>, vector<8x1xf32>
      tpu.vector_store %arg4[%c0_25, %c0_26], %38 {strides = array<i32>} : memref<8x1xf32, #tpu.memory_space<vmem>>, vector<8x1xf32>,
    } else {
    }
    return
  }
  func.func @transform_0(%arg0: i32, %arg1: i32) -> (i32, i32) {
    %c0_i32 = arith.constant 0 : i32
    return %arg0, %arg1 : i32, i32
  }
  func.func @transform_1(%arg0: i32, %arg1: i32) -> (i32, i32) {
    %c0_i32 = arith.constant 0 : i32
    return %arg0, %arg1 : i32, i32
  }
  func.func @transform_2(%arg0: i32, %arg1: i32) -> (i32, i32) {
    %c0_i32 = arith.constant 0 : i32
    %c0_i32_0 = arith.constant 0 : i32
    return %arg0, %c0_i32 : i32, i32
  }
}

</mosaic_0001>

<llo_original>
// kernel: tpu_custom_call.1
$region0: #{tpu_custom_call.1}
  #allocation0 [shape = 'u32[]', space=smem, size = 0x4, offset = 0x4, fixed_abs, tag = 'smem constant byte address 0x4 - core index']
  #allocation1 [shape = 'u32[72,128]{1,0:T(1,128)}', space=vmem, size = 0x9000, scoped, tag = 'internal scratch']
  #allocation2 [shape = 'f32[8,128]{1,0:T(8,128)}', space=vmem, size = 0x1000, scoped, tag = 'scratch operand']
  #allocation3 [shape = 'f32[8,128]{1,0:T(8,128)}', space=vmem, size = 0x1000, scoped, tag = 'scratch operand']
  %s0 = inlined_call_operand.hbm [shape: f32[8,256], index: 0, kind: input, shape index: {}]
  %s1 = inlined_call_operand.hbm [shape: f32[8,256], index: 1, kind: input, shape index: {}]
  %s2 = inlined_call_operand.vmem [shape: f32[8,1], index: 2, kind: output, shape index: {}]
  %s3 = sld [smem:[#allocation0]]
  $region34: #{tpu_custom_call.1} parent=0
    _
  %s5 = ssub.s32 1, %s3
  %s6 = scalar_select 0, %s5, %s3
  $region1: #{tpu_custom_call.1} parent=0
    #allocation4 [shape = 'u8[8192]{0}', space=vmem, size = 0x2000, scoped, tag = 'input window, operand 0, single buffered']
    #allocation5 [shape = 's32[1]{0}', space=sflag, size = 0x4, scoped, tag = 'scoped memory for tpu_custom_call.1']
    #allocation6 [shape = 'u8[8192]{0}', space=vmem, size = 0x2000, scoped, tag = 'input window, operand 1, single buffered']
    #allocation7 [shape = 's32[1]{0}', space=sflag, size = 0x4, scoped, tag = 'scoped memory for tpu_custom_call.1']
    %7 = vsyncpa [#allocation5], 0
    %8 = vsyncpa [#allocation7], 0
    // Predicated region
    $region2: #{tpu_custom_call.1} parent=1 // pred_check
      _
    $region3: #{tpu_custom_call.1} parent=1 // pred_check_branch
      %10 = sbr.rel (0) target = $region5
    $region4: #{tpu_custom_call.1} parent=1 // pred_region
      %12 = vsyncadd [#allocation5], 0
      %s14 = sshll.u32 %s0, 4
      %s15 = int_to_ptr.hbm [resolvable:$true] %s14
      %s16 = sshll.u32 [#allocation4], 4
      %s17 = int_to_ptr.vmem [resolvable:$true] %s16
      %19 = dma.hbm_to_vmem [thread:$0]  %s15, 256, %s17, [#allocation5]
    $region5: #{tpu_custom_call.1} parent=1 // pred_fallthru
      _
    // Predicated region
    $region6: #{tpu_custom_call.1} parent=1 // pred_check
      _
    $region7: #{tpu_custom_call.1} parent=1 // pred_check_branch
      %21 = sbr.rel (0) target = $region9
    $region8: #{tpu_custom_call.1} parent=1 // pred_region
      %23 = vsyncadd [#allocation7], 0
      %s25 = sshll.u32 %s1, 4
      %s26 = int_to_ptr.hbm [resolvable:$true] %s25
      %s27 = sshll.u32 [#allocation6], 4
      %s28 = int_to_ptr.vmem [resolvable:$true] %s27
      %30 = dma.hbm_to_vmem [thread:$0]  %s26, 256, %s28, [#allocation7]
    $region9: #{tpu_custom_call.1} parent=1 // pred_fallthru
      _
    // Predicated region
    $region10: #{tpu_custom_call.1} parent=1 // pred_check
      _
    $region11: #{tpu_custom_call.1} parent=1 // pred_check_branch
      %32 = sbr.rel (0) target = $region13
    $region12: #{tpu_custom_call.1} parent=1 // pred_region
      %34 = dma.done [#allocation5], 256
    $region13: #{tpu_custom_call.1} parent=1 // pred_fallthru
      _
    // Predicated region
    $region14: #{tpu_custom_call.1} parent=1 // pred_check
      _
    $region15: #{tpu_custom_call.1} parent=1 // pred_check_branch
      %36 = sbr.rel (0) target = $region17
    $region16: #{tpu_custom_call.1} parent=1 // pred_region
      %38 = dma.done [#allocation7], 256
    $region17: #{tpu_custom_call.1} parent=1 // pred_fallthru
      _
    %p39 = scmp.eq.s32.totalorder 0, 0
    // Predicated region
    $region18: #{tpu_custom_call.1} parent=1 // pred_check
      %p40 = pneg %p39
    $region19: #{tpu_custom_call.1} parent=1 // pred_check_branch
      %42 = sbr.rel (%p40) target = $region21
    $region20: #{tpu_custom_call.1} parent=1 // pred_region
      %43 = vst [vmem:[#allocation2] sm:$0xff] 0.0
      %44 = vst [vmem:[#allocation3] sm:$0xff] 0.0
    $region21: #{tpu_custom_call.1} parent=1 // pred_fallthru
      _
    %v45 = vld [vmem:[#allocation2] sm:$0xff]
    %v46 = vld [vmem:[#allocation3] sm:$0xff]
    %v47 = vld [vmem:[#allocation4] sm:$0xff]
    %v48 = vld [vmem:[#allocation6] sm:$0xff]
    %v49 = vmul.f32 %v47, %v48
    %v50 = vadd.f32 %v45, %v49
    %v51 = vmul.f32 %v47, %v47
    %v52 = vmul.f32 %v48, %v48
    %v53 = vadd.f32 %v51, %v52
    %v54 = vadd.f32 %v46, %v53
    %v55 = vld [vmem:[#allocation4 + $0x8] sm:$0xff]
    %v56 = vld [vmem:[#allocation6 + $0x8] sm:$0xff]
    %v57 = vmul.f32 %v55, %v56
    %v58 = vadd.f32 %v50, %v57
    %v59 = vmul.f32 %v55, %v55
    %v60 = vmul.f32 %v56, %v56
    %v61 = vadd.f32 %v59, %v60
    %v62 = vadd.f32 %v54, %v61
    %63 = vst [vmem:[#allocation2] sm:$0xff] %v58
    %64 = vst [vmem:[#allocation3] sm:$0xff] %v62
    // Predicated region
    $region22: #{tpu_custom_call.1} parent=1 // pred_check
      %p65 = pneg %p39
    $region23: #{tpu_custom_call.1} parent=1 // pred_check_branch
      %67 = sbr.rel (%p65) target = $region25
    $region24: #{tpu_custom_call.1} parent=1 // pred_region
      %v68 = vld [vmem:[#allocation2] sm:$0xff]
      %69 = vadd.xlane.f32.xlu0 %v68
      %v70 = vpop.xlane.xlu0 %69
      %v71 = vld [vmem:[#allocation3] sm:$0xff]
      %72 = vadd.xlane.f32.xlu0 %v71
      %v73 = vpop.xlane.xlu0 %72
      %v74 = vmul.f32 %v70, 2.0
      %v75 = vadd.f32 %v74, 1e-06
      %v76 = vadd.f32 %v73, 1e-06
      %v77 = vrcp.pop %v76
      %v78 = vmul.f32 %v76, %v77
      %v79 = vsub.f32 1.0, %v78
      %v80 = vmul.f32 %v77, %v79
      %v81 = vadd.f32 %v77, %v80
      %vm82 = vweird.f32 %v76
      %vm83 = vweird.f32 %v77
      %vm84 = vmor %vm82, %vm83
      %v85 = vsel %vm84, %v77, %v81
      %v86 = vand.u32 2147483647, %v76
      %vm87 = vcmp.eq.f32.partialorder %v86, 8.507059e+37
      %v88 = vand.u32 %v76, 2147483648
      %v89 = vor.u32 1.1754944e-38, %v88
      %v90 = vsel %vm87, %v89, %v85
      %v91 = vmul.f32 %v75, %v90
      %vm92 = vcmask 7168
      %93 = vst.msk [vmem:[%s2] sm:$0xff] %vm92, %v91
    $region25: #{tpu_custom_call.1} parent=1 // pred_fallthru
      _
    // Predicated region
    $region26: #{tpu_custom_call.1} parent=1 // pred_check
      _
    $region27: #{tpu_custom_call.1} parent=1 // pred_check_branch
      %95 = sbr.rel (0) target = $region29
    $region28: #{tpu_custom_call.1} parent=1 // pred_region
      _
    $region29: #{tpu_custom_call.1} parent=1 // pred_fallthru
      _
    // Predicated region
    $region30: #{tpu_custom_call.1} parent=1 // pred_check
      _
    $region31: #{tpu_custom_call.1} parent=1 // pred_check_branch
      %97 = sbr.rel (0) target = $region33
    $region32: #{tpu_custom_call.1} parent=1 // pred_region
      _
    $region33: #{tpu_custom_call.1} parent=1 // pred_fallthru
      _
    %98 = vsyncpa [#allocation5], 1
    %99 = vsyncpa [#allocation7], 1

</llo_original>
